<compile_context>
chip_gen: v7x
topology: tpu7x:2x2x1
jax: 0.10.0
libtpu: 0.0.40
codegen_flags: <defaults>
</compile_context>

<pallas_src>
import functools

import jax
import jax.numpy as jnp
from jax.experimental import pallas as pl
from jax.experimental.pallas import tpu as pltpu

# ---------------- model hyperparameters (small, consistent with module) -----
B = 2            # batch
T = 16           # sequence length
IN_SIZE = 32     # input_size
FILTER = 32      # filter_size
KERNEL = 3       # kernel_size (module uses padding=(k-1)//2 for conv1, padding=1 for conv2)
PAD = (KERNEL - 1) // 2
EPS = 1e-5

# MXU-input dtype knob: set to jnp.bfloat16 on v6e/v7x to halve matmul-operand
# vreg/DMA traffic (f32 accumulation is kept via preferred_element_type).  Left
# at f32 here to bit-match the f32 PyTorch module; elementwise math (ReLU,
# LayerNorm, bias) stays f32 regardless — required on v5e (no bf16 VPU/EUP).
MXU_DTYPE = jnp.float32


def _layernorm(h, gamma, beta):
    # LayerNorm over the last dim, biased variance (matches nn.LayerNorm).
    mean = jnp.mean(h, axis=-1, keepdims=True)
    var = jnp.mean(jnp.square(h - mean), axis=-1, keepdims=True)
    return (h - mean) * jax.lax.rsqrt(var + EPS) * gamma + beta


def _im2col_k3(seq):
    """(T, C) -> (T, 3*C) im2col rows for a kernel=3 'same' conv.

    The zero halo is built in-register; column order [x[t-1] | x[t] | x[t+1]]
    matches the (K, C, F) -> (K*C, F) weight reshape done in pack_params.
    (The one-row shifts could also be expressed with pltpu.roll + an iota mask
    to land purely on XLU/VPU slots; at T=16 the static-slice form is equivalent.)
    """
    zrow = jnp.zeros((1, seq.shape[1]), seq.dtype)
    left = jnp.concatenate([zrow, seq[:-1, :]], axis=0)    # row t == seq[t-1]
    right = jnp.concatenate([seq[1:, :], zrow], axis=0)    # row t == seq[t+1]
    return jnp.concatenate([left, seq, right], axis=1)     # (T, 3*C)


def duration_predictor_kernel(x_ref, w1_ref, w2_ref, p_ref, out_ref, *, is_inference):
    # x_ref  : (B, T, IN_SIZE)              unpadded input
    # w1_ref : (KERNEL*IN_SIZE, FILTER)     conv1 weight, taps fused along rows
    # w2_ref : (KERNEL*FILTER, FILTER)      conv2 weight, taps fused along rows
    # p_ref  : (8, FILTER) packed params:
    #          row 0 b1 | 1 g1 | 2 be1 | 3 b2 | 4 g2*wl | 5 [be2@wl+bl, 0...] | 6-7 pad
    # out_ref: (B, T) f32  (int32 when is_inference)
    b_n, t_n, _ = x_ref.shape
    f_n = w1_ref.shape[1]
    x = x_ref[...]

    # ---- Conv1d #1: single (B*T, K*Cin) x (K*Cin, F) MXU matmul ----
    cols1 = jnp.concatenate([_im2col_k3(x[b]) for b in range(b_n)], axis=0)
    h = jnp.dot(cols1.astype(MXU_DTYPE), w1_ref[...].astype(MXU_DTYPE),
                preferred_element_type=jnp.float32)
    h = jnp.maximum(h + p_ref[0:1, :], 0.0)                        # bias + ReLU
    h = _layernorm(h, p_ref[1:2, :], p_ref[2:3, :])                # LayerNorm(F)
    # Dropout_1: identity (eval mode)

    # ---- Conv1d #2: same fused-tap matmul on the hidden sequence ----
    cols2 = jnp.concatenate(
        [_im2col_k3(h[b * t_n:(b + 1) * t_n, :]) for b in range(b_n)], axis=0)
    h2 = jnp.dot(cols2.astype(MXU_DTYPE), w2_ref[...].astype(MXU_DTYPE),
                 preferred_element_type=jnp.float32)
    h2 = jnp.maximum(h2 + p_ref[3:4, :], 0.0)                      # bias + ReLU
    # LayerNorm_2 *without* affine: gamma/beta are folded into the Linear below.
    mean = jnp.mean(h2, axis=-1, keepdims=True)
    var = jnp.mean(jnp.square(h2 - mean), axis=-1, keepdims=True)
    hn = (h2 - mean) * jax.lax.rsqrt(var + EPS)
    # Dropout_2: identity (eval mode)

    # ---- Linear(F -> 1) with folded LN2 affine; lane-dense (B, T) result ----
    wl_row = p_ref[4:5, :].reshape(1, 1, f_n)                      # g2 * wl
    y = jnp.sum(hn.reshape(b_n, t_n, f_n) * wl_row, axis=-1)       # (B, T)
    y = y + p_ref[5:6, 0:1]                                        # be2 @ wl + bl

    if is_inference:
        # torch.clamp(torch.round(out), min=0).long() fused into the store path.
        # (int32 instead of int64: JAX disables 64-bit types by default.)
        out_ref[...] = jnp.maximum(jnp.round(y), 0.0).astype(jnp.int32)
    else:
        out_ref[...] = y


def pack_params(params):
    """One-time parameter preparation (pure layout work, hoisted off the data path)."""
    (w1, b1, g1, be1, w2, b2, g2, be2, wl, bl) = params
    w1f = w1.reshape(KERNEL * IN_SIZE, FILTER)          # taps stacked along rows
    w2f = w2.reshape(KERNEL * FILTER, FILTER)
    wl_fused = (g2[0] * wl[:, 0])[None, :]                          # (1, F)
    bl_fused = jnp.sum(be2[0] * wl[:, 0]) + bl[0, 0]                # scalar
    bl_row = jnp.zeros((1, FILTER), jnp.float32).at[0, 0].set(bl_fused)
    pvec = jnp.concatenate(
        [b1, g1, be1, b2, wl_fused, bl_row, jnp.zeros((2, FILTER), jnp.float32)],
        axis=0)                                                     # (8, F)
    return w1f, w2f, pvec


def duration_predictor_forward(x, packed_params, is_inference=False):
    """x: (B, T, IN_SIZE) float32 -> (B, T) float32 (or int32 if is_inference)."""
    w1f, w2f, pvec = packed_params
    out_dtype = jnp.int32 if is_inference else jnp.float32
    vmem = pl.BlockSpec(memory_space=pltpu.MemorySpace.VMEM)
    return pl.pallas_call(
        functools.partial(duration_predictor_kernel, is_inference=is_inference),
        out_shape=jax.ShapeDtypeStruct((x.shape[0], x.shape[1]), out_dtype),
        in_specs=[vmem, vmem, vmem, vmem],
        out_specs=vmem,
    )(x, w1f, w2f, pvec)


def make_params(key):
    ks = jax.random.split(key, 6)
    w1 = 0.1 * jax.random.normal(ks[0], (KERNEL, IN_SIZE, FILTER), jnp.float32)
    b1 = 0.05 * jax.random.normal(ks[1], (1, FILTER), jnp.float32)
    g1 = 1.0 + 0.1 * jax.random.normal(ks[2], (1, FILTER), jnp.float32)
    be1 = 0.05 * jax.random.normal(ks[3], (1, FILTER), jnp.float32)
    w2 = 0.1 * jax.random.normal(ks[4], (KERNEL, FILTER, FILTER), jnp.float32)
    b2 = 0.05 * jax.random.normal(ks[5], (1, FILTER), jnp.float32)
    kb = jax.random.split(ks[0], 4)
    g2 = 1.0 + 0.1 * jax.random.normal(kb[0], (1, FILTER), jnp.float32)
    be2 = 0.05 * jax.random.normal(kb[1], (1, FILTER), jnp.float32)
    wl = 0.1 * jax.random.normal(kb[2], (FILTER, 1), jnp.float32)
    bl = 0.05 * jax.random.normal(kb[3], (1, 1), jnp.float32)
    return (w1, b1, g1, be1, w2, b2, g2, be2, wl, bl)


def reference_forward(x, params):
    """Pure-JAX reference (same math, written independently with einsum,
    unfused LayerNorm-2 affine + separate Linear)."""
    (w1, b1, g1, be1, w2, b2, g2, be2, wl, bl) = params

    def conv_taps(xin, w, bias):
        xpad = jnp.pad(xin, ((0, 0), (PAD, PAD), (0, 0)))
        taps = jnp.stack([xpad[:, k:k + T, :] for k in range(KERNEL)], axis=0)
        return jnp.einsum("kbtc,kcf->btf", taps, w) + bias[None]

    def ln(h, g, be):
        m = h.mean(-1, keepdims=True)
        v = ((h - m) ** 2).mean(-1, keepdims=True)
        return (h - m) / jnp.sqrt(v + EPS) * g[None] + be[None]

    h = ln(jax.nn.relu(conv_taps(x, w1, b1)), g1, be1)
    h = ln(jax.nn.relu(conv_taps(h, w2, b2)), g2, be2)
    return (jnp.einsum("btf,fo->bto", h, wl) + bl[None])[..., 0]


if __name__ == "__main__":
    key = jax.random.PRNGKey(0)
    k_x, k_p = jax.random.split(key)
    x = jax.random.normal(k_x, (B, T, IN_SIZE), jnp.float32)
    params = make_params(k_p)
    packed = pack_params(params)

    # training / scoring path (float output)
    out = jax.block_until_ready(
        duration_predictor_forward(x, packed, is_inference=False))
    ref = jax.block_until_ready(reference_forward(x, params))
    assert out.shape == (B, T), out.shape
    assert jnp.allclose(out, ref, atol=2e-4, rtol=2e-4), (
        float(jnp.max(jnp.abs(out - ref))))

    # inference path: round / clamp / int cast fused inside the kernel epilogue
    out_i = jax.block_until_ready(
        duration_predictor_forward(x, packed, is_inference=True))
    assert out_i.shape == (B, T) and out_i.dtype == jnp.int32, (out_i.shape, out_i.dtype)
    assert jnp.array_equal(out_i, jnp.maximum(jnp.round(out), 0.0).astype(jnp.int32))

    print("KERNEL_OK")
</pallas_src>

<mosaic_0001>
module attributes {stable_mosaic.version = 11 : i64} {
  func.func @duration_predictor_kernel(%arg0: memref<2x16x32xf32, #tpu.memory_space<vmem>>, %arg1: memref<96x32xf32, #tpu.memory_space<vmem>>, %arg2: memref<96x32xf32, #tpu.memory_space<vmem>>, %arg3: memref<8x32xf32, #tpu.memory_space<vmem>>, %arg4: memref<2x16xf32, #tpu.memory_space<vmem>>) attributes {dimension_semantics = [], scalar_prefetch = 0 : i64, scratch_operands = 0 : i64, tpu.core_type = #tpu.core_type<tc>} {
    %c0 = arith.constant 0 : index
    %c0_0 = arith.constant 0 : index
    %c0_1 = arith.constant 0 : index
    %0 = vector.load %arg0[%c0, %c0_0, %c0_1] : memref<2x16x32xf32, #tpu.memory_space<vmem>>, vector<2x16x32xf32>
    %1 = vector.extract_strided_slice %0 {offsets = [0, 0, 0], sizes = [1, 16, 32], strides = [1, 1, 1]} : vector<2x16x32xf32> to vector<1x16x32xf32>
    %2 = vector.shape_cast %1 : vector<1x16x32xf32> to vector<16x32xf32>
    %cst = arith.constant 0.000000e+00 : f32
    %3 = vector.broadcast %cst : f32 to vector<1x32xf32>
    %4 = vector.extract_strided_slice %2 {offsets = [0, 0], sizes = [15, 32], strides = [1, 1]} : vector<16x32xf32> to vector<15x32xf32>
    %5 = tpu.concatenate %3, %4 in 0 : vector<1x32xf32>, vector<15x32xf32> -> vector<16x32xf32>
    %6 = vector.extract_strided_slice %2 {offsets = [1, 0], sizes = [15, 32], strides = [1, 1]} : vector<16x32xf32> to vector<15x32xf32>
    %7 = tpu.concatenate %6, %3 in 0 : vector<15x32xf32>, vector<1x32xf32> -> vector<16x32xf32>
    %8 = tpu.concatenate %5, %2, %7 in 1 : vector<16x32xf32>, vector<16x32xf32>, vector<16x32xf32> -> vector<16x96xf32>
    %9 = vector.extract_strided_slice %0 {offsets = [1, 0, 0], sizes = [1, 16, 32], strides = [1, 1, 1]} : vector<2x16x32xf32> to vector<1x16x32xf32>
    %10 = vector.shape_cast %9 : vector<1x16x32xf32> to vector<16x32xf32>
    %cst_2 = arith.constant 0.000000e+00 : f32
    %11 = vector.broadcast %cst_2 : f32 to vector<1x32xf32>
    %12 = vector.extract_strided_slice %10 {offsets = [0, 0], sizes = [15, 32], strides = [1, 1]} : vector<16x32xf32> to vector<15x32xf32>
    %13 = tpu.concatenate %11, %12 in 0 : vector<1x32xf32>, vector<15x32xf32> -> vector<16x32xf32>
    %14 = vector.extract_strided_slice %10 {offsets = [1, 0], sizes = [15, 32], strides = [1, 1]} : vector<16x32xf32> to vector<15x32xf32>
    %15 = tpu.concatenate %14, %11 in 0 : vector<15x32xf32>, vector<1x32xf32> -> vector<16x32xf32>
    %16 = tpu.concatenate %13, %10, %15 in 1 : vector<16x32xf32>, vector<16x32xf32>, vector<16x32xf32> -> vector<16x96xf32>
    %17 = tpu.concatenate %8, %16 in 0 : vector<16x96xf32>, vector<16x96xf32> -> vector<32x96xf32>
    %c0_3 = arith.constant 0 : index
    %c0_4 = arith.constant 0 : index
    %18 = vector.load %arg1[%c0_3, %c0_4] : memref<96x32xf32, #tpu.memory_space<vmem>>, vector<96x32xf32>
    %cst_5 = arith.constant dense<0.000000e+00> : vector<32x32xf32>
    %19 = tpu.matmul %17, %18, %cst_5 {dimension_numbers = #tpu.dot_dimension_numbers<[1], [0], [0], [1], [0, 0, 1, 1], [], []>} : vector<32x96xf32>, vector<96x32xf32>, vector<32x32xf32> -> vector<32x32xf32>
    %c0_6 = arith.constant 0 : index
    %c0_7 = arith.constant 0 : index
    %20 = vector.load %arg3[%c0_6, %c0_7] : memref<8x32xf32, #tpu.memory_space<vmem>>, vector<1x32xf32>
    %21 = vector.broadcast %20 : vector<1x32xf32> to vector<32x32xf32>
    %22 = arith.addf %19, %21 : vector<32x32xf32>
    %cst_8 = arith.constant 0.000000e+00 : f32
    %23 = vector.broadcast %cst_8 : f32 to vector<32x32xf32>
    %24 = arith.maximumf %22, %23 : vector<32x32xf32>
    %c1 = arith.constant 1 : index
    %c0_9 = arith.constant 0 : index
    %25 = vector.load %arg3[%c1, %c0_9] : memref<8x32xf32, #tpu.memory_space<vmem>>, vector<1x32xf32>
    %c2 = arith.constant 2 : index
    %c0_10 = arith.constant 0 : index
    %26 = vector.load %arg3[%c2, %c0_10] : memref<8x32xf32, #tpu.memory_space<vmem>>, vector<1x32xf32>
    %cst_11 = arith.constant dense<0.000000e+00> : vector<32xf32>
    %27 = vector.multi_reduction <add>, %24, %cst_11 [1] : vector<32x32xf32> to vector<32xf32>
    %28 = vector.shape_cast %27 : vector<32xf32> to vector<32x1xf32>
    %cst_12 = arith.constant 3.200000e+01 : f32
    %29 = vector.broadcast %cst_12 : f32 to vector<32x1xf32>
    %30 = arith.divf %28, %29 : vector<32x1xf32>
    %31 = vector.broadcast %30 : vector<32x1xf32> to vector<32x32xf32>
    %32 = arith.subf %24, %31 : vector<32x32xf32>
    %33 = arith.mulf %32, %32 : vector<32x32xf32>
    %cst_13 = arith.constant dense<0.000000e+00> : vector<32xf32>
    %34 = vector.multi_reduction <add>, %33, %cst_13 [1] : vector<32x32xf32> to vector<32xf32>
    %35 = vector.shape_cast %34 : vector<32xf32> to vector<32x1xf32>
    %cst_14 = arith.constant 3.200000e+01 : f32
    %36 = vector.broadcast %cst_14 : f32 to vector<32x1xf32>
    %37 = arith.divf %35, %36 : vector<32x1xf32>
    %38 = vector.broadcast %30 : vector<32x1xf32> to vector<32x32xf32>
    %39 = arith.subf %24, %38 : vector<32x32xf32>
    %cst_15 = arith.constant 9.99999974E-6 : f32
    %40 = vector.broadcast %cst_15 : f32 to vector<32x1xf32>
    %41 = arith.addf %37, %40 : vector<32x1xf32>
    %42 = math.rsqrt %41 : vector<32x1xf32>
    %43 = vector.broadcast %42 : vector<32x1xf32> to vector<32x32xf32>
    %44 = arith.mulf %39, %43 : vector<32x32xf32>
    %45 = vector.broadcast %25 : vector<1x32xf32> to vector<32x32xf32>
    %46 = arith.mulf %44, %45 : vector<32x32xf32>
    %47 = vector.broadcast %26 : vector<1x32xf32> to vector<32x32xf32>
    %48 = arith.addf %46, %47 : vector<32x32xf32>
    %49 = vector.extract_strided_slice %48 {offsets = [0, 0], sizes = [16, 32], strides = [1, 1]} : vector<32x32xf32> to vector<16x32xf32>
    %cst_16 = arith.constant 0.000000e+00 : f32
    %50 = vector.broadcast %cst_16 : f32 to vector<1x32xf32>
    %51 = vector.extract_strided_slice %49 {offsets = [0, 0], sizes = [15, 32], strides = [1, 1]} : vector<16x32xf32> to vector<15x32xf32>
    %52 = tpu.concatenate %50, %51 in 0 : vector<1x32xf32>, vector<15x32xf32> -> vector<16x32xf32>
    %53 = vector.extract_strided_slice %49 {offsets = [1, 0], sizes = [15, 32], strides = [1, 1]} : vector<16x32xf32> to vector<15x32xf32>
    %54 = tpu.concatenate %53, %50 in 0 : vector<15x32xf32>, vector<1x32xf32> -> vector<16x32xf32>
    %55 = tpu.concatenate %52, %49, %54 in 1 : vector<16x32xf32>, vector<16x32xf32>, vector<16x32xf32> -> vector<16x96xf32>
    %56 = vector.extract_strided_slice %48 {offsets = [16, 0], sizes = [16, 32], strides = [1, 1]} : vector<32x32xf32> to vector<16x32xf32>
    %cst_17 = arith.constant 0.000000e+00 : f32
    %57 = vector.broadcast %cst_17 : f32 to vector<1x32xf32>
    %58 = vector.extract_strided_slice %56 {offsets = [0, 0], sizes = [15, 32], strides = [1, 1]} : vector<16x32xf32> to vector<15x32xf32>
    %59 = tpu.concatenate %57, %58 in 0 : vector<1x32xf32>, vector<15x32xf32> -> vector<16x32xf32>
    %60 = vector.extract_strided_slice %56 {offsets = [1, 0], sizes = [15, 32], strides = [1, 1]} : vector<16x32xf32> to vector<15x32xf32>
    %61 = tpu.concatenate %60, %57 in 0 : vector<15x32xf32>, vector<1x32xf32> -> vector<16x32xf32>
    %62 = tpu.concatenate %59, %56, %61 in 1 : vector<16x32xf32>, vector<16x32xf32>, vector<16x32xf32> -> vector<16x96xf32>
    %63 = tpu.concatenate %55, %62 in 0 : vector<16x96xf32>, vector<16x96xf32> -> vector<32x96xf32>
    %c0_18 = arith.constant 0 : index
    %c0_19 = arith.constant 0 : index
    %64 = vector.load %arg2[%c0_18, %c0_19] : memref<96x32xf32, #tpu.memory_space<vmem>>, vector<96x32xf32>
    %cst_20 = arith.constant dense<0.000000e+00> : vector<32x32xf32>
    %65 = tpu.matmul %63, %64, %cst_20 {dimension_numbers = #tpu.dot_dimension_numbers<[1], [0], [0], [1], [0, 0, 1, 1], [], []>} : vector<32x96xf32>, vector<96x32xf32>, vector<32x32xf32> -> vector<32x32xf32>
    %c3 = arith.constant 3 : index
    %c0_21 = arith.constant 0 : index
    %66 = vector.load %arg3[%c3, %c0_21] : memref<8x32xf32, #tpu.memory_space<vmem>>, vector<1x32xf32>
    %67 = vector.broadcast %66 : vector<1x32xf32> to vector<32x32xf32>
    %68 = arith.addf %65, %67 : vector<32x32xf32>
    %cst_22 = arith.constant 0.000000e+00 : f32
    %69 = vector.broadcast %cst_22 : f32 to vector<32x32xf32>
    %70 = arith.maximumf %68, %69 : vector<32x32xf32>
    %cst_23 = arith.constant dense<0.000000e+00> : vector<32xf32>
    %71 = vector.multi_reduction <add>, %70, %cst_23 [1] : vector<32x32xf32> to vector<32xf32>
    %72 = vector.shape_cast %71 : vector<32xf32> to vector<32x1xf32>
    %cst_24 = arith.constant 3.200000e+01 : f32
    %73 = vector.broadcast %cst_24 : f32 to vector<32x1xf32>
    %74 = arith.divf %72, %73 : vector<32x1xf32>
    %75 = vector.broadcast %74 : vector<32x1xf32> to vector<32x32xf32>
    %76 = arith.subf %70, %75 : vector<32x32xf32>
    %77 = arith.mulf %76, %76 : vector<32x32xf32>
    %cst_25 = arith.constant dense<0.000000e+00> : vector<32xf32>
    %78 = vector.multi_reduction <add>, %77, %cst_25 [1] : vector<32x32xf32> to vector<32xf32>
    %79 = vector.shape_cast %78 : vector<32xf32> to vector<32x1xf32>
    %cst_26 = arith.constant 3.200000e+01 : f32
    %80 = vector.broadcast %cst_26 : f32 to vector<32x1xf32>
    %81 = arith.divf %79, %80 : vector<32x1xf32>
    %82 = vector.broadcast %74 : vector<32x1xf32> to vector<32x32xf32>
    %83 = arith.subf %70, %82 : vector<32x32xf32>
    %cst_27 = arith.constant 9.99999974E-6 : f32
    %84 = vector.broadcast %cst_27 : f32 to vector<32x1xf32>
    %85 = arith.addf %81, %84 : vector<32x1xf32>
    %86 = math.rsqrt %85 : vector<32x1xf32>
    %87 = vector.broadcast %86 : vector<32x1xf32> to vector<32x32xf32>
    %88 = arith.mulf %83, %87 : vector<32x32xf32>
    %c4 = arith.constant 4 : index
    %c0_28 = arith.constant 0 : index
    %89 = vector.load %arg3[%c4, %c0_28] : memref<8x32xf32, #tpu.memory_space<vmem>>, vector<1x32xf32>
    %90 = vector.shape_cast %89 : vector<1x32xf32> to vector<1x1x32xf32>
    %91 = vector.shape_cast %88 : vector<32x32xf32> to vector<2x16x32xf32>
    %92 = vector.broadcast %90 : vector<1x1x32xf32> to vector<2x16x32xf32>
    %93 = arith.mulf %91, %92 : vector<2x16x32xf32>
    %cst_29 = arith.constant dense<0.000000e+00> : vector<2x16xf32>
    %94 = vector.multi_reduction <add>, %93, %cst_29 [2] : vector<2x16x32xf32> to vector<2x16xf32>
    %c5 = arith.constant 5 : index
    %c0_30 = arith.constant 0 : index
    %95 = vector.load %arg3[%c5, %c0_30] : memref<8x32xf32, #tpu.memory_space<vmem>>, vector<1x1xf32>
    %96 = vector.broadcast %95 : vector<1x1xf32> to vector<2x16xf32>
    %97 = arith.addf %94, %96 : vector<2x16xf32>
    %c0_31 = arith.constant 0 : index
    %c0_32 = arith.constant 0 : index
    %98 = vector.load %arg4[%c0_31, %c0_32] : memref<2x16xf32, #tpu.memory_space<vmem>>, vector<2x16xf32>
    tpu.vector_store %arg4[%c0_31, %c0_32], %97 {strides = array<i32>} : memref<2x16xf32, #tpu.memory_space<vmem>>, vector<2x16xf32>,
    return
  }
}

</mosaic_0001>

<llo_original>
// kernel: tpu_custom_call.1
$region0: #{tpu_custom_call.1}
  #allocation0 [shape = 'u32[]', space=smem, size = 0x4, offset = 0x4, fixed_abs, tag = 'smem constant byte address 0x4 - core index']
  #allocation1 [shape = 'u32[144,128]{1,0:T(1,128)}', space=vmem, size = 0x12000, scoped, tag = 'internal scratch']
  %s0 = inlined_call_operand.vmem [shape: f32[2,16,32], index: 0, kind: input, shape index: {}]
  %s1 = inlined_call_operand.vmem [shape: f32[96,32], index: 1, kind: input, shape index: {}]
  %s2 = inlined_call_operand.vmem [shape: f32[96,32], index: 2, kind: input, shape index: {}]
  %s3 = inlined_call_operand.vmem [shape: f32[8,32], index: 3, kind: input, shape index: {}]
  %s4 = inlined_call_operand.hbm [shape: f32[2,16], index: 4, kind: output, shape index: {}]
  %s5 = sld [smem:[#allocation0]]
  $region26: #{tpu_custom_call.1} parent=0
    _
  %s7 = ssub.s32 1, %s5
  %s8 = scalar_select 0, %s7, %s5
  $region1: #{tpu_custom_call.1} parent=0
    #allocation2 [shape = 'u8[1024]{0}', space=vmem, size = 0x400, scoped, tag = 'output window, operand 0, single buffered']
    #allocation3 [shape = 's32[1]{0}', space=sflag, size = 0x4, scoped, tag = 'scoped memory for tpu_custom_call.1']
    %9 = vsyncpa [#allocation3], 0
    // Predicated region
    $region2: #{tpu_custom_call.1} parent=1 // pred_check
      _
    $region3: #{tpu_custom_call.1} parent=1 // pred_check_branch
      %11 = sbr.rel (0) target = $region5
    $region4: #{tpu_custom_call.1} parent=1 // pred_region
      _
    $region5: #{tpu_custom_call.1} parent=1 // pred_fallthru
      _
    // Predicated region
    $region6: #{tpu_custom_call.1} parent=1 // pred_check
      _
    $region7: #{tpu_custom_call.1} parent=1 // pred_check_branch
      %13 = sbr.rel (0) target = $region9
    $region8: #{tpu_custom_call.1} parent=1 // pred_region
      _
    $region9: #{tpu_custom_call.1} parent=1 // pred_fallthru
      _
    // Predicated region
    $region10: #{tpu_custom_call.1} parent=1 // pred_check
      _
    $region11: #{tpu_custom_call.1} parent=1 // pred_check_branch
      %15 = sbr.rel (0) target = $region13
    $region12: #{tpu_custom_call.1} parent=1 // pred_region
      _
    $region13: #{tpu_custom_call.1} parent=1 // pred_fallthru
      _
    // Predicated region
    $region14: #{tpu_custom_call.1} parent=1 // pred_check
      _
    $region15: #{tpu_custom_call.1} parent=1 // pred_check_branch
      %17 = sbr.rel (0) target = $region17
    $region16: #{tpu_custom_call.1} parent=1 // pred_region
      _
    $region17: #{tpu_custom_call.1} parent=1 // pred_fallthru
      _
    %v18 = vld [vmem:[%s0] sm:$0xff]
    %v19 = vld [vmem:[%s0 + $0x8] sm:$0xff]
    %v20 = vld [vmem:[%s0 + $0x10] sm:$0xff]
    %v21 = vld [vmem:[%s0 + $0x18] sm:$0xff]
    %vm24 = vcmask 1040384
    %v25 = vrot.slane %v18, 7
    %v26 = vrot.slane %v19, 7
    %v27 = vsel %vm24, %v25, %v26
    %v30 = vsel %vm24, 0.0, %v25
    %vm31 = vcmask 1046528
    %v32 = vrot.slane %v18, 1
    %v33 = vrot.slane %v19, 1
    %v34 = vsel %vm31, %v32, %v33
    %v36 = vsel %vm31, %v33, 0.0
    %37 = vrot.lane.b32.xlu0 %v18, 32
    %v38 = vpop.permute.xlu0 %37
    %39 = vrot.lane.b32.xlu0 %v19, 32
    %v40 = vpop.permute.xlu0 %39
    %44 = vrot.lane.b32.xlu0 %v34, 64
    %v45 = vpop.permute.xlu0 %44
    %46 = vrot.lane.b32.xlu0 %v36, 64
    %v47 = vpop.permute.xlu0 %46
    %vm50 = vcmask 261120
    %v51 = vsel %vm50, %v30, %v38
    %v52 = vsel %vm50, %v27, %v40
    %vm53 = vcmask 523264
    %v54 = vsel %vm53, %v51, %v45
    %v55 = vsel %vm53, %v52, %v47
    %v58 = vrot.slane %v20, 7
    %v59 = vrot.slane %v21, 7
    %v60 = vsel %vm24, %v58, %v59
    %v63 = vsel %vm24, 0.0, %v58
    %v64 = vrot.slane %v20, 1
    %v65 = vrot.slane %v21, 1
    %v66 = vsel %vm31, %v64, %v65
    %v68 = vsel %vm31, %v65, 0.0
    %69 = vrot.lane.b32.xlu0 %v20, 32
    %v70 = vpop.permute.xlu0 %69
    %71 = vrot.lane.b32.xlu0 %v21, 32
    %v72 = vpop.permute.xlu0 %71
    %76 = vrot.lane.b32.xlu0 %v66, 64
    %v77 = vpop.permute.xlu0 %76
    %78 = vrot.lane.b32.xlu0 %v68, 64
    %v79 = vpop.permute.xlu0 %78
    %v82 = vsel %vm50, %v63, %v70
    %v83 = vsel %vm50, %v60, %v72
    %v84 = vsel %vm53, %v82, %v77
    %v85 = vsel %vm53, %v83, %v79
    %v86 = vld [vmem:[%s1] sm:$0xff]
    %v87 = vld [vmem:[%s1 + $0x8] sm:$0xff]
    %v88 = vld [vmem:[%s1 + $0x10] sm:$0xff]
    %v89 = vld [vmem:[%s1 + $0x18] sm:$0xff]
    %v90 = vld [vmem:[%s1 + $0x20] sm:$0xff]
    %v91 = vld [vmem:[%s1 + $0x28] sm:$0xff]
    %v92 = vld [vmem:[%s1 + $0x30] sm:$0xff]
    %v93 = vld [vmem:[%s1 + $0x38] sm:$0xff]
    %v94 = vld [vmem:[%s1 + $0x40] sm:$0xff]
    %v95 = vld [vmem:[%s1 + $0x48] sm:$0xff]
    %v96 = vld [vmem:[%s1 + $0x50] sm:$0xff]
    %v97 = vld [vmem:[%s1 + $0x58] sm:$0xff]
    %v98 = vld [vmem:[%s3] sm:$0x1]
    %v99 = vlaneseq
    %v100 = vshrl.u32 %v99, 7
    %v101 = vsub.s32 0, %v100
    %v102 = vrot.slane %v98, %v101
    %vm103 = vcmask 785408
    %v105 = vsel %vm103, %v54, 0
    %v108 = vsel %vm103, %v55, 0
    %v111 = vsel %vm103, %v84, 0
    %v114 = vsel %vm103, %v85, 0
    %116 = vmatprep.subr.mxu0 0.0
    %117 = vmatpush1.msra.mxu0 %v86
    %118 = vmatprep.subr.mxu0 0.0
    %119 = vmatpush1.msra.mxu0 %v87
    %120 = vmatprep.subr.mxu0 0.0
    %121 = vmatpush1.msra.mxu0 %v88
    %122 = vmatprep.subr.mxu0 0.0
    %123 = vmatpush1.msra.mxu0 %v89
    %124 = vmatprep.subr.mxu0 0.0
    %125 = vmatpush1.msra.mxu0 %v90
    %126 = vmatprep.subr.mxu0 0.0
    %127 = vmatpush1.msra.mxu0 %v91
    %128 = vmatprep.subr.mxu0 0.0
    %129 = vmatpush1.msra.mxu0 %v92
    %130 = vmatprep.subr.mxu0 0.0
    %131 = vmatpush1.msra.mxu0 %v93
    %132 = vmatprep.subr.mxu0 0.0
    %133 = vmatpush1.msra.mxu0 %v94
    %134 = vmatprep.subr.mxu0 0.0
    %135 = vmatpush1.msra.mxu0 %v95
    %136 = vmatprep.subr.mxu0 0.0
    %137 = vmatpush1.msra.mxu0 %v96
    %138 = vmatprep.subr.mxu0 0.0
    %139 = vmatpush1.msra.mxu0 %v97
    %140 = vmatprep.subr.mxu0 0.0
    %141 = vmatpush1.msra.mxu0 0.0
    %142 = vmatprep.subr.mxu0 0.0
    %143 = vmatpush1.msra.mxu0 0.0
    %144 = vmatprep.subr.mxu0 0.0
    %145 = vmatpush1.msra.mxu0 0.0
    %146 = vmatprep.subr.mxu0 0.0
    %147 = vmatpush1.msra.mxu0 0.0
    %148 = vmatprep.subr.mxu0 0.0
    %149 = vmatpush1.msra.mxu0 0.0
    %150 = vmatprep.subr.mxu0 0.0
    %151 = vmatpush1.msra.mxu0 0.0
    %152 = vmatprep.subr.mxu0 0.0
    %153 = vmatpush1.msra.mxu0 0.0
    %154 = vmatprep.subr.mxu0 0.0
    %155 = vmatpush1.msra.mxu0 0.0
    %156 = vmatprep.subr.mxu0 0.0
    %157 = vmatpush1.msra.mxu0 0.0
    %158 = vmatprep.subr.mxu0 0.0
    %159 = vmatpush1.msra.mxu0 0.0
    %160 = vmatprep.subr.mxu0 0.0
    %161 = vmatpush1.msra.mxu0 0.0
    %162 = vmatprep.subr.mxu0 0.0
    %163 = vmatpush1.msra.mxu0 0.0
    %164 = vmatprep.subr.mxu0 0.0
    %165 = vmatpush1.msra.mxu0 0.0
    %166 = vmatprep.subr.mxu0 0.0
    %167 = vmatpush1.msra.mxu0 0.0
    %168 = vmatprep.subr.mxu0 0.0
    %169 = vmatpush1.msra.mxu0 0.0
    %170 = vmatprep.subr.mxu0 0.0
    %171 = vmatpush1.msra.mxu0 0.0
    %172 = vmatprep.subr.mxu0 0.0
    %173 = vmatpush1.msra.mxu0 0.0
    %174 = vmatprep.subr.mxu0 0.0
    %175 = vmatpush1.msra.mxu0 0.0
    %176 = vmatprep.subr.mxu0 0.0
    %177 = vmatpush1.msra.mxu0 0.0
    %178 = vmatprep.subr.mxu0 0.0
    %179 = vmatpush1.msra.mxu0 0.0
    %180 = vmatprep.mubr.f32.mxu0 0.0
    %181 = vmatmul.mubr.f32.gmra.mrb[0].mxu0 %v105
    %v182 = vpop.f32.mrb[0].mxu0
    %v183 = vadd.f32 %v102, %v182
    %v184 = vpop.f32.mrb[0].mxu0
    %185 = vmatprep.mubr.f32.mxu0 0.0
    %186 = vmatmul.mubr.f32.gmra.mrb[0].mxu0 %v108
    %v187 = vpop.f32.mrb[0].mxu0
    %v188 = vadd.f32 %v102, %v187
    %v189 = vpop.f32.mrb[0].mxu0
    %190 = vmatprep.mubr.f32.mxu0 0.0
    %191 = vmatmul.mubr.f32.gmra.mrb[0].mxu0 %v111
    %v192 = vpop.f32.mrb[0].mxu0
    %v193 = vadd.f32 %v102, %v192
    %v194 = vpop.f32.mrb[0].mxu0
    %195 = vmatprep.mubr.f32.mxu0 0.0
    %196 = vmatmul.mubr.f32.gmra.mrb[0].mxu0 %v114
    %v197 = vpop.f32.mrb[0].mxu0
    %v198 = vadd.f32 %v102, %v197
    %v199 = vpop.f32.mrb[0].mxu0
    %200 = vdwg.mxu0
    %v201 = vmax.f32 %v183, 0.0
    %v202 = vmax.f32 %v188, 0.0
    %v203 = vmax.f32 %v193, 0.0
    %v204 = vmax.f32 %v198, 0.0
    %v205 = vld [vmem:[%s3 + $0x1] sm:$0x1]
    %v206 = vld [vmem:[%s3 + $0x2] sm:$0x1]
    %v207 = vsel %vm50, %v201, 0.0
    %208 = vadd.xlane.f32.xlu0 %v207
    %v209 = vpop.xlane.xlu0 %208
    %v210 = vsel %vm50, %v202, 0.0
    %211 = vadd.xlane.f32.xlu0 %v210
    %v212 = vpop.xlane.xlu0 %211
    %v213 = vsel %vm50, %v203, 0.0
    %214 = vadd.xlane.f32.xlu0 %v213
    %v215 = vpop.xlane.xlu0 %214
    %v216 = vsel %vm50, %v204, 0.0
    %217 = vadd.xlane.f32.xlu0 %v216
    %v218 = vpop.xlane.xlu0 %217
    %v219 = vrcp.pop 32.0
    %v220 = vmul.f32 %v209, %v219
    %v221 = vmul.f32 %v212, %v219
    %v222 = vmul.f32 %v215, %v219
    %v223 = vmul.f32 %v218, %v219
    %v224 = vsub.f32 %v201, %v220
    %v225 = vsub.f32 %v202, %v221
    %v226 = vsub.f32 %v203, %v222
    %v227 = vsub.f32 %v204, %v223
    %v228 = vmul.f32 %v224, %v224
    %v229 = vmul.f32 %v225, %v225
    %v230 = vmul.f32 %v226, %v226
    %v231 = vmul.f32 %v227, %v227
    %v232 = vsel %vm50, %v228, 0.0
    %233 = vadd.xlane.f32.xlu0 %v232
    %v234 = vpop.xlane.xlu0 %233
    %v235 = vsel %vm50, %v229, 0.0
    %236 = vadd.xlane.f32.xlu0 %v235
    %v237 = vpop.xlane.xlu0 %236
    %v238 = vsel %vm50, %v230, 0.0
    %239 = vadd.xlane.f32.xlu0 %v238
    %v240 = vpop.xlane.xlu0 %239
    %v241 = vsel %vm50, %v231, 0.0
    %242 = vadd.xlane.f32.xlu0 %v241
    %v243 = vpop.xlane.xlu0 %242
    %v244 = vmul.f32 %v234, %v219
    %v245 = vmul.f32 %v237, %v219
    %v246 = vmul.f32 %v240, %v219
    %v247 = vmul.f32 %v243, %v219
    %v248 = vadd.f32 %v244, 1e-05
    %v249 = vadd.f32 %v245, 1e-05
    %v250 = vadd.f32 %v246, 1e-05
    %v251 = vadd.f32 %v247, 1e-05
    %v252 = vrsqrt.pop %v248
    %v253 = vrsqrt.pop %v249
    %v254 = vrsqrt.pop %v250
    %v255 = vrsqrt.pop %v251
    %v256 = vmul.f32 %v224, %v252
    %v257 = vmul.f32 %v225, %v253
    %v258 = vmul.f32 %v226, %v254
    %v259 = vmul.f32 %v227, %v255
    %v260 = vlaneseq
    %v261 = vshrl.u32 %v260, 7
    %v262 = vsub.s32 0, %v261
    %v263 = vrot.slane %v205, %v262
    %v264 = vmul.f32 %v256, %v263
    %v265 = vmul.f32 %v257, %v263
    %v266 = vmul.f32 %v258, %v263
    %v267 = vmul.f32 %v259, %v263
    %v268 = vlaneseq
    %v269 = vshrl.u32 %v268, 7
    %v270 = vsub.s32 0, %v269
    %v271 = vrot.slane %v206, %v270
    %v272 = vadd.f32 %v264, %v271
    %v273 = vadd.f32 %v265, %v271
    %v274 = vadd.f32 %v266, %v271
    %v275 = vadd.f32 %v267, %v271
    %v278 = vrot.slane %v272, 7
    %v279 = vrot.slane %v273, 7
    %v280 = vsel %vm24, %v278, %v279
    %v283 = vsel %vm24, 0.0, %v278
    %v284 = vrot.slane %v272, 1
    %v285 = vrot.slane %v273, 1
    %v286 = vsel %vm31, %v284, %v285
    %v288 = vsel %vm31, %v285, 0.0
    %289 = vrot.lane.b32.xlu0 %v272, 32
    %v290 = vpop.permute.xlu0 %289
    %291 = vrot.lane.b32.xlu0 %v273, 32
    %v292 = vpop.permute.xlu0 %291
    %296 = vrot.lane.b32.xlu0 %v286, 64
    %v297 = vpop.permute.xlu0 %296
    %298 = vrot.lane.b32.xlu0 %v288, 64
    %v299 = vpop.permute.xlu0 %298
    %v302 = vsel %vm50, %v283, %v290
    %v303 = vsel %vm50, %v280, %v292
    %v304 = vsel %vm53, %v302, %v297
    %v305 = vsel %vm53, %v303, %v299
    %v308 = vrot.slane %v274, 7
    %v309 = vrot.slane %v275, 7
    %v310 = vsel %vm24, %v308, %v309
    %v313 = vsel %vm24, 0.0, %v308
    %v314 = vrot.slane %v274, 1
    %v315 = vrot.slane %v275, 1
    %v316 = vsel %vm31, %v314, %v315
    %v318 = vsel %vm31, %v315, 0.0
    %319 = vrot.lane.b32.xlu0 %v274, 32
    %v320 = vpop.permute.xlu0 %319
    %321 = vrot.lane.b32.xlu0 %v275, 32
    %v322 = vpop.permute.xlu0 %321
    %326 = vrot.lane.b32.xlu0 %v316, 64
    %v327 = vpop.permute.xlu0 %326
    %328 = vrot.lane.b32.xlu0 %v318, 64
    %v329 = vpop.permute.xlu0 %328
    %v332 = vsel %vm50, %v313, %v320
    %v333 = vsel %vm50, %v310, %v322
    %v334 = vsel %vm53, %v332, %v327
    %v335 = vsel %vm53, %v333, %v329
    %v336 = vld [vmem:[%s2] sm:$0xff]
    %v337 = vld [vmem:[%s2 + $0x8] sm:$0xff]
    %v338 = vld [vmem:[%s2 + $0x10] sm:$0xff]
    %v339 = vld [vmem:[%s2 + $0x18] sm:$0xff]
    %v340 = vld [vmem:[%s2 + $0x20] sm:$0xff]
    %v341 = vld [vmem:[%s2 + $0x28] sm:$0xff]
    %v342 = vld [vmem:[%s2 + $0x30] sm:$0xff]
    %v343 = vld [vmem:[%s2 + $0x38] sm:$0xff]
    %v344 = vld [vmem:[%s2 + $0x40] sm:$0xff]
    %v345 = vld [vmem:[%s2 + $0x48] sm:$0xff]
    %v346 = vld [vmem:[%s2 + $0x50] sm:$0xff]
    %v347 = vld [vmem:[%s2 + $0x58] sm:$0xff]
    %v348 = vld [vmem:[%s3 + $0x3] sm:$0x1]
    %v349 = vlaneseq
    %v350 = vshrl.u32 %v349, 7
    %v351 = vsub.s32 0, %v350
    %v352 = vrot.slane %v348, %v351
    %v354 = vsel %vm103, %v304, 0
    %v357 = vsel %vm103, %v305, 0
    %v360 = vsel %vm103, %v334, 0
    %v363 = vsel %vm103, %v335, 0
    %365 = vmatprep.subr.mxu0 0.0
    %366 = vmatpush1.msra.mxu0 %v336
    %367 = vmatprep.subr.mxu0 0.0
    %368 = vmatpush1.msra.mxu0 %v337
    %369 = vmatprep.subr.mxu0 0.0
    %370 = vmatpush1.msra.mxu0 %v338
    %371 = vmatprep.subr.mxu0 0.0
    %372 = vmatpush1.msra.mxu0 %v339
    %373 = vmatprep.subr.mxu0 0.0
    %374 = vmatpush1.msra.mxu0 %v340
    %375 = vmatprep.subr.mxu0 0.0
    %376 = vmatpush1.msra.mxu0 %v341
    %377 = vmatprep.subr.mxu0 0.0
    %378 = vmatpush1.msra.mxu0 %v342
    %379 = vmatprep.subr.mxu0 0.0
    %380 = vmatpush1.msra.mxu0 %v343
    %381 = vmatprep.subr.mxu0 0.0
    %382 = vmatpush1.msra.mxu0 %v344
    %383 = vmatprep.subr.mxu0 0.0
    %384 = vmatpush1.msra.mxu0 %v345
    %385 = vmatprep.subr.mxu0 0.0
    %386 = vmatpush1.msra.mxu0 %v346
    %387 = vmatprep.subr.mxu0 0.0
    %388 = vmatpush1.msra.mxu0 %v347
    %389 = vmatprep.subr.mxu0 0.0
    %390 = vmatpush1.msra.mxu0 0.0
    %391 = vmatprep.subr.mxu0 0.0
    %392 = vmatpush1.msra.mxu0 0.0
    %393 = vmatprep.subr.mxu0 0.0
    %394 = vmatpush1.msra.mxu0 0.0
    %395 = vmatprep.subr.mxu0 0.0
    %396 = vmatpush1.msra.mxu0 0.0
    %397 = vmatprep.subr.mxu0 0.0
    %398 = vmatpush1.msra.mxu0 0.0
    %399 = vmatprep.subr.mxu0 0.0
    %400 = vmatpush1.msra.mxu0 0.0
    %401 = vmatprep.subr.mxu0 0.0
    %402 = vmatpush1.msra.mxu0 0.0
    %403 = vmatprep.subr.mxu0 0.0
    %404 = vmatpush1.msra.mxu0 0.0
    %405 = vmatprep.subr.mxu0 0.0
    %406 = vmatpush1.msra.mxu0 0.0
    %407 = vmatprep.subr.mxu0 0.0
    %408 = vmatpush1.msra.mxu0 0.0
    %409 = vmatprep.subr.mxu0 0.0
    %410 = vmatpush1.msra.mxu0 0.0
    %411 = vmatprep.subr.mxu0 0.0
    %412 = vmatpush1.msra.mxu0 0.0
    %413 = vmatprep.subr.mxu0 0.0
    %414 = vmatpush1.msra.mxu0 0.0
    %415 = vmatprep.subr.mxu0 0.0
    %416 = vmatpush1.msra.mxu0 0.0
    %417 = vmatprep.subr.mxu0 0.0
    %418 = vmatpush1.msra.mxu0 0.0
    %419 = vmatprep.subr.mxu0 0.0
    %420 = vmatpush1.msra.mxu0 0.0
    %421 = vmatprep.subr.mxu0 0.0
    %422 = vmatpush1.msra.mxu0 0.0
    %423 = vmatprep.subr.mxu0 0.0
    %424 = vmatpush1.msra.mxu0 0.0
    %425 = vmatprep.subr.mxu0 0.0
    %426 = vmatpush1.msra.mxu0 0.0
    %427 = vmatprep.subr.mxu0 0.0
    %428 = vmatpush1.msra.mxu0 0.0
    %429 = vmatprep.mubr.f32.mxu0 0.0
    %430 = vmatmul.mubr.f32.gmra.mrb[0].mxu0 %v354
    %v431 = vpop.f32.mrb[0].mxu0
    %v432 = vadd.f32 %v352, %v431
    %v433 = vpop.f32.mrb[0].mxu0
    %434 = vmatprep.mubr.f32.mxu0 0.0
    %435 = vmatmul.mubr.f32.gmra.mrb[0].mxu0 %v357
    %v436 = vpop.f32.mrb[0].mxu0
    %v437 = vadd.f32 %v352, %v436
    %v438 = vpop.f32.mrb[0].mxu0
    %439 = vmatprep.mubr.f32.mxu0 0.0
    %440 = vmatmul.mubr.f32.gmra.mrb[0].mxu0 %v360
    %v441 = vpop.f32.mrb[0].mxu0
    %v442 = vadd.f32 %v352, %v441
    %v443 = vpop.f32.mrb[0].mxu0
    %444 = vmatprep.mubr.f32.mxu0 0.0
    %445 = vmatmul.mubr.f32.gmra.mrb[0].mxu0 %v363
    %v446 = vpop.f32.mrb[0].mxu0
    %v447 = vadd.f32 %v352, %v446
    %v448 = vpop.f32.mrb[0].mxu0
    %449 = vdwg.mxu0
    %v450 = vmax.f32 %v432, 0.0
    %v451 = vmax.f32 %v437, 0.0
    %v452 = vmax.f32 %v442, 0.0
    %v453 = vmax.f32 %v447, 0.0
    %v454 = vsel %vm50, %v450, 0.0
    %455 = vadd.xlane.f32.xlu0 %v454
    %v456 = vpop.xlane.xlu0 %455
    %v457 = vsel %vm50, %v451, 0.0
    %458 = vadd.xlane.f32.xlu0 %v457
    %v459 = vpop.xlane.xlu0 %458
    %v460 = vsel %vm50, %v452, 0.0
    %461 = vadd.xlane.f32.xlu0 %v460
    %v462 = vpop.xlane.xlu0 %461
    %v463 = vsel %vm50, %v453, 0.0
    %464 = vadd.xlane.f32.xlu0 %v463
    %v465 = vpop.xlane.xlu0 %464
    %v466 = vmul.f32 %v456, %v219
    %v467 = vmul.f32 %v459, %v219
    %v468 = vmul.f32 %v462, %v219
    %v469 = vmul.f32 %v465, %v219
    %v470 = vsub.f32 %v450, %v466
    %v471 = vsub.f32 %v451, %v467
    %v472 = vsub.f32 %v452, %v468
    %v473 = vsub.f32 %v453, %v469
    %v474 = vmul.f32 %v470, %v470
    %v475 = vmul.f32 %v471, %v471
    %v476 = vmul.f32 %v472, %v472
    %v477 = vmul.f32 %v473, %v473
    %v478 = vsel %vm50, %v474, 0.0
    %479 = vadd.xlane.f32.xlu0 %v478
    %v480 = vpop.xlane.xlu0 %479
    %v481 = vsel %vm50, %v475, 0.0
    %482 = vadd.xlane.f32.xlu0 %v481
    %v483 = vpop.xlane.xlu0 %482
    %v484 = vsel %vm50, %v476, 0.0
    %485 = vadd.xlane.f32.xlu0 %v484
    %v486 = vpop.xlane.xlu0 %485
    %v487 = vsel %vm50, %v477, 0.0
    %488 = vadd.xlane.f32.xlu0 %v487
    %v489 = vpop.xlane.xlu0 %488
    %v490 = vmul.f32 %v480, %v219
    %v491 = vmul.f32 %v483, %v219
    %v492 = vmul.f32 %v486, %v219
    %v493 = vmul.f32 %v489, %v219
    %v494 = vadd.f32 %v490, 1e-05
    %v495 = vadd.f32 %v491, 1e-05
    %v496 = vadd.f32 %v492, 1e-05
    %v497 = vadd.f32 %v493, 1e-05
    %v498 = vrsqrt.pop %v494
    %v499 = vrsqrt.pop %v495
    %v500 = vrsqrt.pop %v496
    %v501 = vrsqrt.pop %v497
    %v502 = vmul.f32 %v470, %v498
    %v503 = vmul.f32 %v471, %v499
    %v504 = vmul.f32 %v472, %v500
    %v505 = vmul.f32 %v473, %v501
    %v506 = vld [vmem:[%s3 + $0x4] sm:$0x1]
    %v507 = vlaneseq
    %v508 = vshrl.u32 %v507, 7
    %v509 = vsub.s32 0, %v508
    %v510 = vrot.slane %v506, %v509
    %v511 = vmul.f32 %v502, %v510
    %v512 = vmul.f32 %v503, %v510
    %v513 = vmul.f32 %v504, %v510
    %v514 = vmul.f32 %v505, %v510
    %v515 = vsel %vm50, %v511, 0.0
    %516 = vadd.xlane.f32.xlu0 %v515
    %v517 = vpop.xlane.xlu0 %516
    %v518 = vsel %vm50, %v512, 0.0
    %519 = vadd.xlane.f32.xlu0 %v518
    %v520 = vpop.xlane.xlu0 %519
    %v521 = vsel %vm50, %v513, 0.0
    %522 = vadd.xlane.f32.xlu0 %v521
    %v523 = vpop.xlane.xlu0 %522
    %v524 = vsel %vm50, %v514, 0.0
    %525 = vadd.xlane.f32.xlu0 %v524
    %v526 = vpop.xlane.xlu0 %525
    %v527 = vld [vmem:[%s3 + $0x5] sm:$0x1]
    %s529 = vtos %v527
    %v530 = vstv %s529
    %v532 = vadd.f32 %v517, %v530
    %v533 = vadd.f32 %v520, %v530
    %v534 = vadd.f32 %v523, %v530
    %v535 = vadd.f32 %v526, %v530
    %v540 = vlaneseq
    %v541 = vand.u32 %v540, 127
    %v542 = vlaneseq
    %v543 = vshrl.u32 %v542, 7
    %v544 = vsub.s32 %v541, %v543
    %v545 = vrot.slane %v532, %v544
    %v546 = vadd.s32 %v541, 4294967288
    %v547 = vlaneseq
    %v548 = vshrl.u32 %v547, 7
    %v549 = vsub.s32 %v546, %v548
    %v550 = vrot.slane %v533, %v549
    %vm551 = vcmask 130112
    %v552 = vsel %vm551, %v550, %v545
    %v553 = vlaneseq
    %v554 = vshrl.u32 %v553, 7
    %v555 = vsub.s32 %v541, %v554
    %v556 = vrot.slane %v534, %v555
    %v557 = vlaneseq
    %v558 = vshrl.u32 %v557, 7
    %v559 = vsub.s32 %v546, %v558
    %v560 = vrot.slane %v535, %v559
    %v561 = vsel %vm551, %v560, %v556
    %vm562 = vcmask 1041409
    %v563 = vsel %vm562, %v561, %v552
    %vm565 = vcmask 123904
    %566 = vst.msk [vmem:[#allocation2] sm:$0x3] %vm565, %v563
    // Predicated region
    $region18: #{tpu_custom_call.1} parent=1 // pred_check
      _
    $region19: #{tpu_custom_call.1} parent=1 // pred_check_branch
      %568 = sbr.rel (0) target = $region21
    $region20: #{tpu_custom_call.1} parent=1 // pred_region
      %s570 = ssub.s32 32, 32
      %571 = vsyncadd [#allocation3], %s570
      %s573 = sshll.u32 [#allocation2], 4
      %s574 = int_to_ptr.vmem [resolvable:$true] %s573
      %576 = dma.vmem_to_hbm [thread:$0]  %s574, 32, %s4, [#allocation3]
    $region21: #{tpu_custom_call.1} parent=1 // pred_fallthru
      _
    // Predicated region
    $region22: #{tpu_custom_call.1} parent=1 // pred_check
      _
    $region23: #{tpu_custom_call.1} parent=1 // pred_check_branch
      %578 = sbr.rel (0) target = $region25
    $region24: #{tpu_custom_call.1} parent=1 // pred_region
      %579 = dma.done [#allocation3], 32
    $region25: #{tpu_custom_call.1} parent=1 // pred_fallthru
      _
    %580 = vsyncpa [#allocation3], 1

</llo_original>
